<compile_context>
chip_gen: v7x
topology: tpu7x:2x2x1
jax: 0.10.0
libtpu: 0.0.40
codegen_flags: <defaults>
</compile_context>

<pallas_src>
import numpy as np
import jax
import jax.numpy as jnp
from jax.experimental import pallas as pl
from jax.experimental.pallas import tpu as pltpu

C_PAD = 128  # lane-dense padded class dimension


def _round_up(x, m):
    return ((x + m - 1) // m) * m


# ----------------------------------------------------------------------------
# Pallas kernel: one fused GEMM (bf16 in, f32 accum) + log_softmax over 128
# lane-dense (padded) classes.
# ----------------------------------------------------------------------------
def enc_cytoself_kernel(x_ref, w_ref, b_ref, out_ref):
    x = x_ref[...]                                     # (TM, D)    bf16
    w = w_ref[...]                                     # (D, C_PAD) bf16
    b = b_ref[...]                                     # (1, C_PAD) f32 (pad lanes = -1e30)

    # Fused latent_out + classifier linear: single MXU pass, f32 accumulation.
    logits = jnp.dot(x, w, preferred_element_type=jnp.float32) + b   # (TM, C_PAD) f32

    # Numerically stable LogSoftmax in f32.  Padded lanes carry -1e30 logits,
    # so exp() of them is exactly 0 and they do not affect max / logsumexp.
    m = jnp.max(logits, axis=-1, keepdims=True)
    shifted = logits - m
    lse = jnp.log(jnp.sum(jnp.exp(shifted), axis=-1, keepdims=True))
    out_ref[...] = shifted - lse


def enc_cytoself_forward(x_nchw, w_fused_bf16, b_fused_pad, n_classes, *, tm=128):
    """x_nchw: (B, C, H, W) float32.  Returns log-probabilities (B, n_classes)."""
    B = x_nchw.shape[0]
    x_flat = x_nchw.reshape(B, -1)                     # matches x.view(B, -1)
    D = x_flat.shape[1]

    # Batch tile: multiple of 8 sublanes, capped at 128 rows per step.
    tm = min(tm, _round_up(B, 8))
    B_pad = _round_up(B, tm)
    if B_pad != B:
        x_flat = jnp.pad(x_flat, ((0, B_pad - B), (0, 0)))

    x_bf16 = x_flat.astype(jnp.bfloat16)               # halve HBM traffic on the
                                                       # only batch-scaling tensor

    out_pad = pl.pallas_call(
        enc_cytoself_kernel,
        out_shape=jax.ShapeDtypeStruct((B_pad, C_PAD), jnp.float32),
        grid=(pl.cdiv(B_pad, tm),),
        in_specs=[
            pl.BlockSpec((tm, D), lambda i: (i, 0)),       # streamed per tile
            pl.BlockSpec((D, C_PAD), lambda i: (0, 0)),    # resident weight
            pl.BlockSpec((1, C_PAD), lambda i: (0, 0)),    # resident bias
        ],
        out_specs=pl.BlockSpec((tm, C_PAD), lambda i: (i, 0)),
        compiler_params=pltpu.CompilerParams(
            dimension_semantics=("parallel",)),            # megacore on v7x
    )(x_bf16, w_fused_bf16, b_fused_pad)

    return out_pad[:B, :n_classes]


# ----------------------------------------------------------------------------
# Deterministic parameter construction (synthetic; no checkpoint load)
# ----------------------------------------------------------------------------
def make_params(key, in_features, n_latent_dim, n_classes):
    k1, k2, k3, k4 = jax.random.split(key, 4)

    # PyTorch nn.Linear default init: U(-1/sqrt(fan_in), 1/sqrt(fan_in))
    lim1 = 1.0 / np.sqrt(in_features)
    w1 = jax.random.uniform(k1, (n_latent_dim, in_features),
                            minval=-lim1, maxval=lim1, dtype=jnp.float32)
    b1 = jax.random.uniform(k2, (n_latent_dim,),
                            minval=-lim1, maxval=lim1, dtype=jnp.float32)

    # spectral_norm: divide weight by its largest singular value (exact SVD
    # instead of PyTorch's single power-iteration estimate; host-side glue).
    sigma = jnp.linalg.norm(w1, ord=2)
    w1 = w1 / sigma

    lim2 = 1.0 / np.sqrt(n_latent_dim)
    w2 = jax.random.uniform(k3, (n_classes, n_latent_dim),
                            minval=-lim2, maxval=lim2, dtype=jnp.float32)
    b2 = jax.random.uniform(k4, (n_classes,),
                            minval=-lim2, maxval=lim2, dtype=jnp.float32)

    # Kernel-oriented (in, out) weights.
    return w1.T, b1, w2.T, b2


def fuse_and_pad_params(w1_t, b1, w2_t, b2):
    """Algebraically fuse the two linears and pad the class dim to C_PAD lanes."""
    D = w1_t.shape[0]
    C = w2_t.shape[1]

    w_fused = w1_t @ w2_t                              # (D, C) f32, done once on host
    b_fused = b1 @ w2_t + b2                           # (C,)   f32

    w_pad = jnp.zeros((D, C_PAD), jnp.float32).at[:, :C].set(w_fused)
    # Padded classes get -1e30 bias (and zero weights) -> effectively -inf logits.
    b_pad = jnp.full((1, C_PAD), -1e30, jnp.float32).at[0, :C].set(b_fused)

    return w_pad.astype(jnp.bfloat16), b_pad


if __name__ == "__main__":
    # Small shapes consistent with the module:
    # batch=2, imsize_compressed=[4, 4, 8] -> flattened 128, n_latent_dim=32, 25 classes.
    B, C_in, H, W = 2, 8, 4, 4          # prod = 128 flattened features
    n_latent_dim = 32
    n_classes = 25

    key = jax.random.PRNGKey(0)
    kx, kp = jax.random.split(key)
    x = jax.random.normal(kx, (B, C_in, H, W), dtype=jnp.float32)

    w1_t, b1, w2_t, b2 = make_params(kp, C_in * H * W, n_latent_dim, n_classes)
    w_fused_bf16, b_fused_pad = fuse_and_pad_params(w1_t, b1, w2_t, b2)

    logit = enc_cytoself_forward(x, w_fused_bf16, b_fused_pad, n_classes)
    jax.block_until_ready(logit)

    # --- correctness checks ---------------------------------------------------
    x_flat = x.reshape(B, -1)

    # 1) Mirror of the kernel math (bf16 GEMM inputs, f32 accum, fused weights).
    mirror_logits = (jnp.dot(x_flat.astype(jnp.bfloat16), w_fused_bf16,
                             preferred_element_type=jnp.float32) + b_fused_pad)
    mirror = jax.nn.log_softmax(mirror_logits, axis=-1)[:, :n_classes]
    np.testing.assert_allclose(np.asarray(logit), np.asarray(mirror),
                               rtol=1e-4, atol=1e-4)

    # 2) Original unfused f32 semantics (loose tolerance: bf16 GEMM inputs).
    z_ref = x_flat @ w1_t + b1[None, :]
    lg_ref = z_ref @ w2_t + b2[None, :]
    ref = jax.nn.log_softmax(lg_ref, axis=-1)
    np.testing.assert_allclose(np.asarray(logit), np.asarray(ref),
                               rtol=5e-2, atol=5e-2)

    print("KERNEL_OK")
</pallas_src>

<mosaic_0001>
module attributes {stable_mosaic.version = 11 : i64} {
  func.func @enc_cytoself_kernel(%arg0: i32, %arg1: memref<8x128xbf16, #tpu.memory_space<vmem>>, %arg2: memref<128x128xbf16, #tpu.memory_space<vmem>>, %arg3: memref<1x128xf32, #tpu.memory_space<vmem>>, %arg4: memref<8x128xf32, #tpu.memory_space<vmem>>) attributes {dimension_semantics = [#tpu.dimension_semantics<parallel>], iteration_bounds = array<i64: 1>, scalar_prefetch = 0 : i64, scratch_operands = 0 : i64, tpu.core_type = #tpu.core_type<tc>, window_params = [{transform_indices = @transform_0, window_bounds = array<i64: 8, 128>}, {pipeline_mode = #tpu.pipeline_mode<synchronous>, transform_indices = @transform_1, window_bounds = array<i64: 128, 128>}, {pipeline_mode = #tpu.pipeline_mode<synchronous>, transform_indices = @transform_2, window_bounds = array<i64: 1, 128>}, {transform_indices = @transform_3, window_bounds = array<i64: 8, 128>}]} {
    %c0 = arith.constant 0 : index
    %c0_0 = arith.constant 0 : index
    %0 = vector.load %arg1[%c0, %c0_0] : memref<8x128xbf16, #tpu.memory_space<vmem>>, vector<8x128xbf16>
    %c0_1 = arith.constant 0 : index
    %c0_2 = arith.constant 0 : index
    %1 = vector.load %arg2[%c0_1, %c0_2] : memref<128x128xbf16, #tpu.memory_space<vmem>>, vector<128x128xbf16>
    %c0_3 = arith.constant 0 : index
    %c0_4 = arith.constant 0 : index
    %2 = vector.load %arg3[%c0_3, %c0_4] : memref<1x128xf32, #tpu.memory_space<vmem>>, vector<1x128xf32>
    %cst = arith.constant dense<0.000000e+00> : vector<8x128xf32>
    %3 = tpu.matmul %0, %1, %cst {dimension_numbers = #tpu.dot_dimension_numbers<[1], [0], [0], [1], [0, 0, 1, 1], [], []>} : vector<8x128xbf16>, vector<128x128xbf16>, vector<8x128xf32> -> vector<8x128xf32>
    %4 = vector.broadcast %2 : vector<1x128xf32> to vector<8x128xf32>
    %5 = arith.addf %3, %4 : vector<8x128xf32>
    %cst_5 = arith.constant dense<0xFF800000> : vector<8xf32>
    %6 = vector.multi_reduction <maximumf>, %5, %cst_5 [1] : vector<8x128xf32> to vector<8xf32>
    %7 = vector.shape_cast %6 : vector<8xf32> to vector<8x1xf32>
    %8 = vector.broadcast %7 : vector<8x1xf32> to vector<8x128xf32>
    %9 = arith.subf %5, %8 : vector<8x128xf32>
    %10 = math.exp %9 : vector<8x128xf32>
    %cst_6 = arith.constant dense<0.000000e+00> : vector<8xf32>
    %11 = vector.multi_reduction <add>, %10, %cst_6 [1] : vector<8x128xf32> to vector<8xf32>
    %12 = vector.shape_cast %11 : vector<8xf32> to vector<8x1xf32>
    %13 = math.log %12 : vector<8x1xf32>
    %14 = vector.broadcast %13 : vector<8x1xf32> to vector<8x128xf32>
    %15 = arith.subf %9, %14 : vector<8x128xf32>
    %c0_7 = arith.constant 0 : index
    %c0_8 = arith.constant 0 : index
    %16 = vector.load %arg4[%c0_7, %c0_8] : memref<8x128xf32, #tpu.memory_space<vmem>>, vector<8x128xf32>
    tpu.vector_store %arg4[%c0_7, %c0_8], %15 {strides = array<i32>} : memref<8x128xf32, #tpu.memory_space<vmem>>, vector<8x128xf32>,
    return
  }
  func.func @transform_0(%arg0: i32) -> (i32, i32) {
    %c0_i32 = arith.constant 0 : i32
    %c0_i32_0 = arith.constant 0 : i32
    return %arg0, %c0_i32 : i32, i32
  }
  func.func @transform_1(%arg0: i32) -> (i32, i32) {
    %c0_i32 = arith.constant 0 : i32
    %c0_i32_0 = arith.constant 0 : i32
    %c0_i32_1 = arith.constant 0 : i32
    return %c0_i32, %c0_i32_0 : i32, i32
  }
  func.func @transform_2(%arg0: i32) -> (i32, i32) {
    %c0_i32 = arith.constant 0 : i32
    %c0_i32_0 = arith.constant 0 : i32
    %c0_i32_1 = arith.constant 0 : i32
    return %c0_i32, %c0_i32_0 : i32, i32
  }
  func.func @transform_3(%arg0: i32) -> (i32, i32) {
    %c0_i32 = arith.constant 0 : i32
    %c0_i32_0 = arith.constant 0 : i32
    return %arg0, %c0_i32 : i32, i32
  }
}

</mosaic_0001>

<llo_original>
// kernel: tpu_custom_call.1
$region0: #{tpu_custom_call.1}
  #allocation0 [shape = 'u32[]', space=smem, size = 0x4, offset = 0x4, fixed_abs, tag = 'smem constant byte address 0x4 - core index']
  #allocation1 [shape = 'u32[144,128]{1,0:T(1,128)}', space=vmem, size = 0x12000, scoped, tag = 'internal scratch']
  %s0 = inlined_call_operand.hbm [shape: bf16[8,128], index: 0, kind: input, shape index: {}]
  %s1 = inlined_call_operand.hbm [shape: bf16[128,128], index: 1, kind: input, shape index: {}]
  %s2 = inlined_call_operand.vmem [shape: f32[1,128], index: 2, kind: input, shape index: {}]
  %s3 = inlined_call_operand.hbm [shape: f32[8,128], index: 3, kind: output, shape index: {}]
  %s4 = sld [smem:[#allocation0]]
  $region30: #{tpu_custom_call.1} parent=0
    _
  %s6 = ssub.s32 1, %s4
  %s7 = scalar_select 0, %s6, %s4
  $region1: #{tpu_custom_call.1} parent=0
    #allocation2 [shape = 'u8[2048]{0}', space=vmem, size = 0x800, scoped, tag = 'input window, operand 0, single buffered']
    #allocation3 [shape = 's32[1]{0}', space=sflag, size = 0x4, scoped, tag = 'scoped memory for tpu_custom_call.1']
    #allocation4 [shape = 's32[1]{0}', space=sflag, size = 0x4, scoped, tag = 'scoped memory for tpu_custom_call.1']
    #allocation5 [shape = 'u8[32768]{0}', space=vmem, size = 0x8000, scoped, tag = 'input window, operand 1, single buffered']
    #allocation6 [shape = 's32[1]{0}', space=sflag, size = 0x4, scoped, tag = 'scoped memory for tpu_custom_call.1']
    #allocation7 [shape = 'u8[4096]{0}', space=vmem, size = 0x1000, scoped, tag = 'output window, operand 0, single buffered']
    %8 = vsyncpa [#allocation3], 0
    %9 = vsyncpa [#allocation6], 0
    %10 = vsyncpa [#allocation4], 0
    // Predicated region
    $region2: #{tpu_custom_call.1} parent=1 // pred_check
      _
    $region3: #{tpu_custom_call.1} parent=1 // pred_check_branch
      %12 = sbr.rel (0) target = $region5
    $region4: #{tpu_custom_call.1} parent=1 // pred_region
      %s14 = ssub.s32 64, 64
      %15 = vsyncadd [#allocation3], %s14
      %s17 = sshll.u32 [#allocation2], 4
      %s18 = int_to_ptr.vmem [resolvable:$true] %s17
      %20 = dma.hbm_to_vmem [thread:$0]  %s0, 64, %s18, [#allocation3]
    $region5: #{tpu_custom_call.1} parent=1 // pred_fallthru
      _
    // Predicated region
    $region6: #{tpu_custom_call.1} parent=1 // pred_check
      _
    $region7: #{tpu_custom_call.1} parent=1 // pred_check_branch
      %22 = sbr.rel (0) target = $region9
    $region8: #{tpu_custom_call.1} parent=1 // pred_region
      %s24 = ssub.s32 1024, 1024
      %25 = vsyncadd [#allocation6], %s24
      %s26 = sshll.u32 [#allocation5], 4
      %s27 = int_to_ptr.vmem [resolvable:$true] %s26
      %32 = dma.hbm_to_vmem [thread:$0]  %s1, 1024, %s27, [#allocation6], 64, 64, 4
    $region9: #{tpu_custom_call.1} parent=1 // pred_fallthru
      _
    // Predicated region
    $region10: #{tpu_custom_call.1} parent=1 // pred_check
      _
    $region11: #{tpu_custom_call.1} parent=1 // pred_check_branch
      %34 = sbr.rel (0) target = $region13
    $region12: #{tpu_custom_call.1} parent=1 // pred_region
      _
    $region13: #{tpu_custom_call.1} parent=1 // pred_fallthru
      _
    // Predicated region
    $region14: #{tpu_custom_call.1} parent=1 // pred_check
      _
    $region15: #{tpu_custom_call.1} parent=1 // pred_check_branch
      %36 = sbr.rel (0) target = $region17
    $region16: #{tpu_custom_call.1} parent=1 // pred_region
      %37 = dma.done [#allocation3], 64
    $region17: #{tpu_custom_call.1} parent=1 // pred_fallthru
      _
    // Predicated region
    $region18: #{tpu_custom_call.1} parent=1 // pred_check
      _
    $region19: #{tpu_custom_call.1} parent=1 // pred_check_branch
      %39 = sbr.rel (0) target = $region21
    $region20: #{tpu_custom_call.1} parent=1 // pred_region
      %40 = dma.done [#allocation6], 1024
    $region21: #{tpu_custom_call.1} parent=1 // pred_fallthru
      _
    %v42 = vld [vmem:[#allocation2] sm:$0xf]
    %v43 = vld [vmem:[#allocation5] sm:$0xf]
    %v44 = vld [vmem:[#allocation5 + $0x4] sm:$0xf]
    %v45 = vld [vmem:[#allocation5 + $0x8] sm:$0xf]
    %v46 = vld [vmem:[#allocation5 + $0xc] sm:$0xf]
    %v47 = vld [vmem:[#allocation5 + $0x10] sm:$0xf]
    %v48 = vld [vmem:[#allocation5 + $0x14] sm:$0xf]
    %v49 = vld [vmem:[#allocation5 + $0x18] sm:$0xf]
    %v50 = vld [vmem:[#allocation5 + $0x1c] sm:$0xf]
    %v51 = vld [vmem:[#allocation5 + $0x20] sm:$0xf]
    %v52 = vld [vmem:[#allocation5 + $0x24] sm:$0xf]
    %v53 = vld [vmem:[#allocation5 + $0x28] sm:$0xf]
    %v54 = vld [vmem:[#allocation5 + $0x2c] sm:$0xf]
    %v55 = vld [vmem:[#allocation5 + $0x30] sm:$0xf]
    %v56 = vld [vmem:[#allocation5 + $0x34] sm:$0xf]
    %v57 = vld [vmem:[#allocation5 + $0x38] sm:$0xf]
    %v58 = vld [vmem:[#allocation5 + $0x3c] sm:$0xf]
    %v59 = vld [vmem:[%s2] sm:$0x1]
    %v61 = vlaneseq
    %v62 = vshrl.u32 %v61, 7
    %v63 = vsub.s32 0, %v62
    %v64 = vrot.slane %v59, %v63
    %v82 = vunpack.c.l.b16 %v43
    %v83 = vunpack.c.l.b16 %v44
    %v84 = vunpack.c.l.b16 %v45
    %v85 = vunpack.c.l.b16 %v46
    %v86 = vunpack.c.l.b16 %v47
    %v87 = vunpack.c.l.b16 %v48
    %v88 = vunpack.c.l.b16 %v49
    %v89 = vunpack.c.l.b16 %v50
    %v90 = vunpack.c.l.b16 %v51
    %v91 = vunpack.c.l.b16 %v52
    %v92 = vunpack.c.l.b16 %v53
    %v93 = vunpack.c.l.b16 %v54
    %v94 = vunpack.c.l.b16 %v55
    %v95 = vunpack.c.l.b16 %v56
    %v96 = vunpack.c.l.b16 %v57
    %v97 = vunpack.c.l.b16 %v58
    %v98 = vpack.c.b16 %v83, %v82
    %v99 = vpack.c.b16 %v85, %v84
    %v100 = vpack.c.b16 %v87, %v86
    %v101 = vpack.c.b16 %v89, %v88
    %v102 = vpack.c.b16 %v91, %v90
    %v103 = vpack.c.b16 %v93, %v92
    %v104 = vpack.c.b16 %v95, %v94
    %v105 = vpack.c.b16 %v97, %v96
    %114 = vmatprep.subr.bf16.mxu0 0
    %115 = vmatpush1.bf16.msra.mxu0 %v98
    %116 = vmatprep.subr.bf16.mxu0 0
    %117 = vmatpush1.bf16.msra.mxu0 %v99
    %118 = vmatprep.subr.bf16.mxu0 0
    %119 = vmatpush1.bf16.msra.mxu0 %v100
    %120 = vmatprep.subr.bf16.mxu0 0
    %121 = vmatpush1.bf16.msra.mxu0 %v101
    %122 = vmatprep.subr.bf16.mxu0 0
    %123 = vmatpush1.bf16.msra.mxu0 %v102
    %124 = vmatprep.subr.bf16.mxu0 0
    %125 = vmatpush1.bf16.msra.mxu0 %v103
    %126 = vmatprep.subr.bf16.mxu0 0
    %127 = vmatpush1.bf16.msra.mxu0 %v104
    %128 = vmatprep.subr.bf16.mxu0 0
    %129 = vmatpush1.bf16.msra.mxu0 %v105
    %130 = vmatprep.subr.bf16.mxu0 0
    %131 = vmatpush1.bf16.msra.mxu0 0
    %132 = vmatprep.subr.bf16.mxu0 0
    %133 = vmatpush1.bf16.msra.mxu0 0
    %134 = vmatprep.subr.bf16.mxu0 0
    %135 = vmatpush1.bf16.msra.mxu0 0
    %136 = vmatprep.subr.bf16.mxu0 0
    %137 = vmatpush1.bf16.msra.mxu0 0
    %138 = vmatprep.subr.bf16.mxu0 0
    %139 = vmatpush1.bf16.msra.mxu0 0
    %140 = vmatprep.subr.bf16.mxu0 0
    %141 = vmatpush1.bf16.msra.mxu0 0
    %142 = vmatprep.subr.bf16.mxu0 0
    %143 = vmatpush1.bf16.msra.mxu0 0
    %144 = vmatprep.subr.bf16.mxu0 0
    %145 = vmatpush1.bf16.msra.mxu0 0
    %146 = vmatprep.mubr.bf16.mxu0 0
    %147 = vmatmul.mubr.bf16.gmra.mrb[0].mxu0 %v42
    %v148 = vpop.f32.mrb[0].mxu0
    %v149 = vadd.f32 %v64, %v148
    %v150 = vpop.f32.mrb[0].mxu0
    %v151 = vpop.f32.mrb[0].mxu0
    %v152 = vpop.f32.mrb[0].mxu0
    %153 = vdwg.mxu0
    %154 = vmax.xlane.f32.xlu0 %v149
    %v155 = vpop.xlane.xlu0 %154
    %v156 = vsub.f32 %v149, %v155
    %v157 = vmul.f32 %v156, 1.442695
    %v158 = vpow.pop %v157
    %159 = vadd.xlane.f32.xlu0 %v158
    %v160 = vpop.xlane.xlu0 %159
    %v161 = vlog2.pop %v160
    %v162 = vmul.f32 %v161, 0.6931472
    %v163 = vsub.f32 %v156, %v162
    %164 = vst [vmem:[#allocation7] sm:$0xff] %v163
    // Predicated region
    $region22: #{tpu_custom_call.1} parent=1 // pred_check
      _
    $region23: #{tpu_custom_call.1} parent=1 // pred_check_branch
      %166 = sbr.rel (0) target = $region25
    $region24: #{tpu_custom_call.1} parent=1 // pred_region
      %s168 = ssub.s32 128, 128
      %169 = vsyncadd [#allocation4], %s168
      %s171 = sshll.u32 [#allocation7], 4
      %s172 = int_to_ptr.vmem [resolvable:$true] %s171
      %174 = dma.vmem_to_hbm [thread:$0]  %s172, 128, %s3, [#allocation4]
    $region25: #{tpu_custom_call.1} parent=1 // pred_fallthru
      _
    // Predicated region
    $region26: #{tpu_custom_call.1} parent=1 // pred_check
      _
    $region27: #{tpu_custom_call.1} parent=1 // pred_check_branch
      %176 = sbr.rel (0) target = $region29
    $region28: #{tpu_custom_call.1} parent=1 // pred_region
      %177 = dma.done [#allocation4], 128
    $region29: #{tpu_custom_call.1} parent=1 // pred_fallthru
      _
    %178 = vsyncpa [#allocation3], 1
    %179 = vsyncpa [#allocation6], 1
    %180 = vsyncpa [#allocation4], 1

</llo_original>
